<compile_context>
chip_gen: v5e
topology: v5e:2x2
jax: 0.10.0
libtpu: 0.0.40
codegen_flags: <defaults>
</compile_context>

<pallas_src>
import jax
import jax.numpy as jnp
from jax.experimental import pallas as pl
from jax.experimental.pallas import tpu as pltpu

BN_EPS = 1e-5
TM_MAX = 512                      # rows per grid step in the 1x1 matmuls
LANE = 128                        # channel padding granularity (lane-dense)
VMEM_LIMIT = 64 * 1024 * 1024


def _ceil_to(x, m):
    return (x + m - 1) // m * m


def _pick_tile_m(M, tmax=TM_MAX):
    """Largest M tile that avoids padding the activation (pad = fallback)."""
    if M <= tmax:
        return M, M                       # single full-extent block
    for t in (tmax, 384, 256, 192, 128, 64, 32, 16, 8):
        if t <= tmax and M % t == 0:
            return t, M
    return tmax, _ceil_to(M, tmax)        # rare fallback: pad M


# ---------------------------------------------------------------------------
# 1x1 conv as matmul: relu?((x @ w) + bias (+ residual)), f32 accumulation.
# Full-K / full-N blocks, grid over M only (activation read once from HBM).
# ---------------------------------------------------------------------------
def _make_mm_kernel(apply_relu, has_residual):
    def kernel(*refs):
        if has_residual:
            x_ref, w_ref, b_ref, r_ref, o_ref = refs
        else:
            x_ref, w_ref, b_ref, o_ref = refs
            r_ref = None
        acc = jnp.dot(x_ref[...].astype(jnp.bfloat16), w_ref[...],
                      preferred_element_type=jnp.float32)
        acc = acc + b_ref[...]
        if r_ref is not None:
            acc = acc + r_ref[...].astype(jnp.float32)    # residual add in f32
        if apply_relu:
            acc = jnp.maximum(acc, 0.0)
        o_ref[...] = acc.astype(o_ref.dtype)
    return kernel


def fused_matmul_bias(x2d, w, bias, *, residual=None, relu=True,
                      out_dtype=jnp.bfloat16):
    M, K = x2d.shape
    Kw, Np = w.shape
    assert K == Kw
    TM, Mp = _pick_tile_m(M)

    wb = w.astype(jnp.bfloat16)
    b2 = bias.reshape(1, Np).astype(jnp.float32)

    xin, rin = x2d, residual
    if Mp != M:                                           # fallback only
        xin = jnp.pad(xin, ((0, Mp - M), (0, 0)))
        if rin is not None:
            rin = jnp.pad(rin, ((0, Mp - M), (0, 0)))

    args = [xin, wb, b2]
    in_specs = [
        pl.BlockSpec((TM, K), lambda i: (i, 0)),
        pl.BlockSpec((K, Np), lambda i: (0, 0)),
        pl.BlockSpec((1, Np), lambda i: (0, 0)),
    ]
    if rin is not None:
        args.append(rin)
        in_specs.append(pl.BlockSpec((TM, Np), lambda i: (i, 0)))

    out = pl.pallas_call(
        _make_mm_kernel(relu, residual is not None),
        out_shape=jax.ShapeDtypeStruct((Mp, Np), out_dtype),
        grid=(Mp // TM,),
        in_specs=in_specs,
        out_specs=pl.BlockSpec((TM, Np), lambda i: (i, 0)),
        compiler_params=pltpu.CompilerParams(
            dimension_semantics=("parallel",),
            vmem_limit_bytes=VMEM_LIMIT),
    )(*args)
    if Mp != M:
        out = out[:M]
    return out


# ---------------------------------------------------------------------------
# conv3 (1x1) + projection shortcut (1x1, stride) fused:
#   relu(x @ w + xs @ ws + bias)
# ---------------------------------------------------------------------------
def _dual_mm_kernel(x_ref, w_ref, xs_ref, ws_ref, b_ref, o_ref):
    acc = jnp.dot(x_ref[...].astype(jnp.bfloat16), w_ref[...],
                  preferred_element_type=jnp.float32)
    acc = acc + jnp.dot(xs_ref[...].astype(jnp.bfloat16), ws_ref[...],
                        preferred_element_type=jnp.float32)
    acc = acc + b_ref[...]
    o_ref[...] = jnp.maximum(acc, 0.0).astype(o_ref.dtype)


def fused_dual_matmul_bias_relu(x2d, w, xs2d, ws, bias, *,
                                out_dtype=jnp.bfloat16):
    M, K1 = x2d.shape
    K1w, Np = w.shape
    M2, K2 = xs2d.shape
    assert K1 == K1w and M2 == M and ws.shape == (K2, Np)
    TM, Mp = _pick_tile_m(M)

    wb = w.astype(jnp.bfloat16)
    wsb = ws.astype(jnp.bfloat16)
    b2 = bias.reshape(1, Np).astype(jnp.float32)
    xin, xsin = x2d, xs2d
    if Mp != M:                                           # fallback only
        xin = jnp.pad(xin, ((0, Mp - M), (0, 0)))
        xsin = jnp.pad(xsin, ((0, Mp - M), (0, 0)))

    out = pl.pallas_call(
        _dual_mm_kernel,
        out_shape=jax.ShapeDtypeStruct((Mp, Np), out_dtype),
        grid=(Mp // TM,),
        in_specs=[
            pl.BlockSpec((TM, K1), lambda i: (i, 0)),
            pl.BlockSpec((K1, Np), lambda i: (0, 0)),
            pl.BlockSpec((TM, K2), lambda i: (i, 0)),
            pl.BlockSpec((K2, Np), lambda i: (0, 0)),
            pl.BlockSpec((1, Np), lambda i: (0, 0)),
        ],
        out_specs=pl.BlockSpec((TM, Np), lambda i: (i, 0)),
        compiler_params=pltpu.CompilerParams(
            dimension_semantics=("parallel",),
            vmem_limit_bytes=VMEM_LIMIT),
    )(xin, wb, xsin, wsb, b2)
    if Mp != M:
        out = out[:M]
    return out


# ---------------------------------------------------------------------------
# conv2: 3x3, pad=1, stride s, folded BN + ReLU.
# Stride-phase split, flattened rows -> per-tap contiguous pl.ds windows,
# f32 VMEM scratch accumulator, grid (image, Cout tile).
# ---------------------------------------------------------------------------
def conv3x3_bn_relu(x_nhwc, w_oihw, scale, bias, stride, *, cout_pad):
    N, H, W, Cin = x_nhwc.shape
    Cout = w_oihw.shape[0]
    s = stride
    s2 = s * s
    Ho = (H + 2 - 3) // s + 1
    Wo = (W + 2 - 3) // s + 1
    Hp = (H + 2 + s - 1) // s
    Wp = (W + 2 + s - 1) // s
    L = Hp * Wp
    Lp = _ceil_to(L + Wp, 8)        # guard rows: flattened tap windows stay in-bounds

    # TODO(synk): stage the zero-pad + phase split inside the kernel (memset a
    # VMEM scratch + strided row copies) so conv2 reads its input from HBM once.
    xb = x_nhwc.astype(jnp.bfloat16)
    xp = jnp.pad(xb, ((0, 0), (1, 1), (1, 1), (0, 0)))
    phases = []
    for a in range(s):
        for b in range(s):
            ph = xp[:, a::s, b::s, :]
            ph = jnp.pad(ph, ((0, 0), (0, Hp - ph.shape[1]),
                              (0, Wp - ph.shape[2]), (0, 0)))
            phases.append(ph.reshape(N, L, Cin))
    xph = jnp.stack(phases, axis=1)                        # (N, s2, L, Cin)
    xph = jnp.pad(xph, ((0, 0), (0, 0), (0, Lp - L), (0, 0)))
    xph = xph.reshape(N * s2, Lp, Cin)

    # OIHW -> (tap, cin, cout), BN scale folded, channels padded lane-dense.
    cin_real = w_oihw.shape[1]
    w_taps = jnp.transpose(w_oihw, (2, 3, 1, 0)).reshape(9, cin_real, Cout)
    w_taps = w_taps * scale[None, None, :]
    w_taps = jnp.pad(w_taps, ((0, 0), (0, Cin - cin_real),
                              (0, cout_pad - Cout))).astype(jnp.bfloat16)
    b2 = jnp.pad(bias, (0, cout_pad - Cout)).reshape(1, cout_pad)
    b2 = b2.astype(jnp.float32)

    if cout_pad <= 256:
        TC = cout_pad
    elif cout_pad % 256 == 0:
        TC = 256
    else:
        TC = 128
    n_ct = cout_pad // TC
    HWp = Ho * Wp

    def kernel(x_ref, w_ref, b_ref, o_ref, acc_ref):
        for kh in range(3):
            for kw in range(3):
                tap = kh * 3 + kw
                phase = (kh % s) * s + (kw % s)
                off = (kh // s) * Wp + (kw // s)
                window = x_ref[phase, pl.ds(off, HWp), :]          # contiguous
                contrib = jnp.dot(window, w_ref[tap],
                                  preferred_element_type=jnp.float32)
                if tap == 0:
                    acc_ref[...] = contrib
                else:
                    acc_ref[...] += contrib
        acc = jnp.maximum(acc_ref[...] + b_ref[...], 0.0)
        acc = acc.reshape(Ho, Wp, TC)[:, :Wo, :]       # drop wrap columns once
        o_ref[...] = acc[None].astype(o_ref.dtype)

    # TODO(synk): for very large H*W, additionally tile over output-row blocks
    # (halo windows) instead of one whole-image block per grid step.
    return pl.pallas_call(
        kernel,
        out_shape=jax.ShapeDtypeStruct((N, Ho, Wo, cout_pad), jnp.bfloat16),
        grid=(N, n_ct),
        in_specs=[
            pl.BlockSpec((s2, Lp, Cin), lambda n, j: (n, 0, 0)),
            pl.BlockSpec((9, Cin, TC), lambda n, j: (0, 0, j)),
            pl.BlockSpec((1, TC), lambda n, j: (0, j)),
        ],
        out_specs=pl.BlockSpec((1, Ho, Wo, TC), lambda n, j: (n, 0, 0, j)),
        scratch_shapes=[pltpu.VMEM((HWp, TC), jnp.float32)],
        compiler_params=pltpu.CompilerParams(
            dimension_semantics=("parallel", "parallel"),
            vmem_limit_bytes=VMEM_LIMIT),
    )(xph, w_taps, b2)


# ---------------------------------------------------------------------------
# Parameters (torch-layout conv weights OIHW) and BN folding
# ---------------------------------------------------------------------------
def init_bottleneck_params(key, in_planes, planes, stride):
    expansion = 4
    out_planes = expansion * planes
    keys = jax.random.split(key, 16)

    def conv_w(k, cout, cin, kh, kw):
        fan_in = cin * kh * kw
        return jax.random.normal(k, (cout, cin, kh, kw), jnp.float32) / jnp.sqrt(fan_in)

    def bn_params(k, c):
        k1, k2, k3, k4 = jax.random.split(k, 4)
        gamma = jax.random.uniform(k1, (c,), jnp.float32, 0.5, 1.5)
        beta = 0.1 * jax.random.normal(k2, (c,), jnp.float32)
        mean = 0.1 * jax.random.normal(k3, (c,), jnp.float32)
        var = jax.random.uniform(k4, (c,), jnp.float32, 0.5, 1.5)
        return gamma, beta, mean, var

    p = {
        "w1": conv_w(keys[0], planes, in_planes, 1, 1),
        "bn1": bn_params(keys[1], planes),
        "w2": conv_w(keys[2], planes, planes, 3, 3),
        "bn2": bn_params(keys[3], planes),
        "w3": conv_w(keys[4], out_planes, planes, 1, 1),
        "bn3": bn_params(keys[5], out_planes),
        "stride": stride,
        "in_planes": in_planes,
        "planes": planes,
        "out_planes": out_planes,
    }
    if stride != 1 or in_planes != out_planes:
        p["ws"] = conv_w(keys[6], out_planes, in_planes, 1, 1)
        p["bns"] = bn_params(keys[7], out_planes)
    return p


def _fold_bn(bn):
    gamma, beta, mean, var = bn
    scale = gamma / jnp.sqrt(var + BN_EPS)
    bias = beta - mean * scale
    return scale, bias


# ---------------------------------------------------------------------------
# Bottleneck forward (Pallas) — activations NHWC
# ---------------------------------------------------------------------------
def bottleneck_forward(x_nhwc, p):
    N, H, W, Cin = x_nhwc.shape
    stride = p["stride"]
    P = p["planes"]
    E = p["out_planes"]
    Pp = _ceil_to(P, LANE)          # lane-dense intermediate channel counts
    Ep = _ceil_to(E, LANE)

    # conv1 (1x1) + bn1 + relu — BN folded into weights, Cout padded to Pp.
    s1, b1 = _fold_bn(p["bn1"])
    w1 = jnp.pad(p["w1"][:, :, 0, 0].T * s1[None, :], ((0, 0), (0, Pp - P)))
    b1p = jnp.pad(b1, (0, Pp - P))
    o1 = fused_matmul_bias(x_nhwc.reshape(N * H * W, Cin), w1, b1p,
                           relu=True, out_dtype=jnp.bfloat16)
    o1 = o1.reshape(N, H, W, Pp)

    # conv2 (3x3, stride, pad=1) + bn2 + relu.
    s2c, b2c = _fold_bn(p["bn2"])
    o2 = conv3x3_bn_relu(o1, p["w2"], s2c, b2c, stride, cout_pad=Pp)
    Ho, Wo = o2.shape[1], o2.shape[2]
    o2_2d = o2.reshape(N * Ho * Wo, Pp)

    # conv3 (1x1) + bn3 + shortcut + relu.
    s3, b3 = _fold_bn(p["bn3"])
    w3 = jnp.pad(p["w3"][:, :, 0, 0].T * s3[None, :], ((0, Pp - P), (0, Ep - E)))
    b3p = jnp.pad(b3, (0, Ep - E))

    if "ws" in p:
        ss, bs = _fold_bn(p["bns"])
        ws = jnp.pad(p["ws"][:, :, 0, 0].T * ss[None, :], ((0, 0), (0, Ep - E)))
        bsp = jnp.pad(bs, (0, Ep - E))
        # TODO(synk): read the strided shortcut rows in-kernel (strided pl.ds
        # DMA / Element index_map) instead of this wrapper-side gather.
        xs = x_nhwc[:, ::stride, ::stride, :].reshape(N * Ho * Wo, Cin)
        out2d = fused_dual_matmul_bias_relu(o2_2d, w3, xs, ws, b3p + bsp,
                                            out_dtype=jnp.bfloat16)
    else:
        assert Cin == E and stride == 1, "identity shortcut needs matching shapes"
        res = x_nhwc.reshape(N * Ho * Wo, E)            # kept in f32 for the add
        if Ep != E:
            res = jnp.pad(res, ((0, 0), (0, Ep - E)))
        out2d = fused_matmul_bias(o2_2d, w3, b3p, residual=res, relu=True,
                                  out_dtype=jnp.bfloat16)

    out = out2d.reshape(N, Ho, Wo, Ep)
    if Ep != E:
        out = out[..., :E]
    return out


# ---------------------------------------------------------------------------
# Pure-JAX reference (lax conv) for correctness check
# ---------------------------------------------------------------------------
def bottleneck_reference(x_nhwc, p):
    def conv(x, w_oihw, stride=1, pad=0):
        w_hwio = jnp.transpose(w_oihw, (2, 3, 1, 0))
        return jax.lax.conv_general_dilated(
            x, w_hwio, (stride, stride), [(pad, pad), (pad, pad)],
            dimension_numbers=("NHWC", "HWIO", "NHWC"))

    def bn(x, params):
        gamma, beta, mean, var = params
        return (x - mean) / jnp.sqrt(var + BN_EPS) * gamma + beta

    stride = p["stride"]
    out = jax.nn.relu(bn(conv(x_nhwc, p["w1"]), p["bn1"]))
    out = jax.nn.relu(bn(conv(out, p["w2"], stride=stride, pad=1), p["bn2"]))
    out = bn(conv(out, p["w3"]), p["bn3"])
    if "ws" in p:
        sc = bn(conv(x_nhwc, p["ws"], stride=stride), p["bns"])
    else:
        sc = x_nhwc
    return jax.nn.relu(out + sc)


def _check(name, x, params):
    out = jax.block_until_ready(bottleneck_forward(x, params))
    ref = jax.block_until_ready(bottleneck_reference(x, params))
    assert out.shape == ref.shape, (name, out.shape, ref.shape)
    # bf16 MXU inputs / bf16 HBM writeback vs a pure-f32 lax reference: use a
    # bf16-appropriate tolerance (still catches tap/BN/layout bugs, O(1) errs).
    ref_max = float(jnp.max(jnp.abs(ref)))
    err = float(jnp.max(jnp.abs(out.astype(jnp.float32) - ref)))
    tol = 7e-2 * (1.0 + ref_max)
    if err > tol:
        raise AssertionError(f"{name}: max abs err {err} > tol {tol}")


if __name__ == "__main__":
    key = jax.random.PRNGKey(0)
    k_x, k_p1, k_p2 = jax.random.split(key, 3)

    N, H, W = 2, 8, 8
    in_planes, planes = 16, 4
    x_nhwc = jax.random.normal(k_x, (N, H, W, in_planes), jnp.float32)

    # Projection-shortcut path (stride 2, fused dual-matmul epilogue).
    params_proj = init_bottleneck_params(k_p1, in_planes, planes, stride=2)
    _check("projection", x_nhwc, params_proj)

    # Identity-shortcut path (stride 1, f32 residual add in epilogue).
    params_id = init_bottleneck_params(k_p2, in_planes, planes, stride=1)
    _check("identity", x_nhwc, params_id)

    print("KERNEL_OK")
</pallas_src>

<mosaic_0001>
module attributes {stable_mosaic.version = 11 : i64} {
  func.func @kernel(%arg0: i32, %arg1: memref<128x16xf32, #tpu.memory_space<vmem>>, %arg2: memref<16x128xbf16, #tpu.memory_space<vmem>>, %arg3: memref<1x128xf32, #tpu.memory_space<vmem>>, %arg4: memref<128x128xbf16, #tpu.memory_space<vmem>>) attributes {dimension_semantics = [#tpu.dimension_semantics<parallel>], iteration_bounds = array<i64: 1>, scalar_prefetch = 0 : i64, scratch_operands = 0 : i64, tpu.core_type = #tpu.core_type<tc>, window_params = [{transform_indices = @transform_0, window_bounds = array<i64: 128, 16>}, {pipeline_mode = #tpu.pipeline_mode<synchronous>, transform_indices = @transform_1, window_bounds = array<i64: 16, 128>}, {pipeline_mode = #tpu.pipeline_mode<synchronous>, transform_indices = @transform_2, window_bounds = array<i64: 1, 128>}, {transform_indices = @transform_3, window_bounds = array<i64: 128, 128>}]} {
    %c0 = arith.constant 0 : index
    %c0_0 = arith.constant 0 : index
    %0 = vector.load %arg1[%c0, %c0_0] : memref<128x16xf32, #tpu.memory_space<vmem>>, vector<128x16xf32>
    %1 = arith.truncf %0 : vector<128x16xf32> to vector<128x16xbf16>
    %c0_1 = arith.constant 0 : index
    %c0_2 = arith.constant 0 : index
    %2 = vector.load %arg2[%c0_1, %c0_2] : memref<16x128xbf16, #tpu.memory_space<vmem>>, vector<16x128xbf16>
    %cst = arith.constant dense<0.000000e+00> : vector<128x128xf32>
    %3 = tpu.matmul %1, %2, %cst {dimension_numbers = #tpu.dot_dimension_numbers<[1], [0], [0], [1], [0, 0, 1, 1], [], []>} : vector<128x16xbf16>, vector<16x128xbf16>, vector<128x128xf32> -> vector<128x128xf32>
    %c0_3 = arith.constant 0 : index
    %c0_4 = arith.constant 0 : index
    %4 = vector.load %arg3[%c0_3, %c0_4] : memref<1x128xf32, #tpu.memory_space<vmem>>, vector<1x128xf32>
    %5 = vector.broadcast %4 : vector<1x128xf32> to vector<128x128xf32>
    %6 = arith.addf %3, %5 : vector<128x128xf32>
    %cst_5 = arith.constant 0.000000e+00 : f32
    %7 = vector.broadcast %cst_5 : f32 to vector<128x128xf32>
    %8 = arith.maximumf %6, %7 : vector<128x128xf32>
    %9 = arith.truncf %8 : vector<128x128xf32> to vector<128x128xbf16>
    %c0_6 = arith.constant 0 : index
    %c0_7 = arith.constant 0 : index
    %10 = vector.load %arg4[%c0_6, %c0_7] : memref<128x128xbf16, #tpu.memory_space<vmem>>, vector<128x128xbf16>
    tpu.vector_store %arg4[%c0_6, %c0_7], %9 {strides = array<i32>} : memref<128x128xbf16, #tpu.memory_space<vmem>>, vector<128x128xbf16>,
    return
  }
  func.func @transform_0(%arg0: i32) -> (i32, i32) {
    %c0_i32 = arith.constant 0 : i32
    %c0_i32_0 = arith.constant 0 : i32
    return %arg0, %c0_i32 : i32, i32
  }
  func.func @transform_1(%arg0: i32) -> (i32, i32) {
    %c0_i32 = arith.constant 0 : i32
    %c0_i32_0 = arith.constant 0 : i32
    %c0_i32_1 = arith.constant 0 : i32
    return %c0_i32, %c0_i32_0 : i32, i32
  }
  func.func @transform_2(%arg0: i32) -> (i32, i32) {
    %c0_i32 = arith.constant 0 : i32
    %c0_i32_0 = arith.constant 0 : i32
    %c0_i32_1 = arith.constant 0 : i32
    return %c0_i32, %c0_i32_0 : i32, i32
  }
  func.func @transform_3(%arg0: i32) -> (i32, i32) {
    %c0_i32 = arith.constant 0 : i32
    %c0_i32_0 = arith.constant 0 : i32
    return %arg0, %c0_i32 : i32, i32
  }
}

</mosaic_0001>

<llo_original>
// kernel: tpu_custom_call.1
$region0: #{tpu_custom_call.1}
  #allocation0 [shape = 'u32[]', space=smem, size = 0x4, offset = 0x4, fixed_abs, tag = 'smem constant byte address 0x4 - core index']
  #allocation1 [shape = 'u32[72,128]{1,0:T(1,128)}', space=vmem, size = 0x9000, scoped, tag = 'internal scratch']
  %s0 = inlined_call_operand.vmem [shape: f32[128,16], index: 0, kind: input, shape index: {}]
  %s1 = inlined_call_operand.vmem [shape: bf16[16,128], index: 1, kind: input, shape index: {}]
  %s2 = inlined_call_operand.vmem [shape: f32[1,128], index: 2, kind: input, shape index: {}]
  %s3 = inlined_call_operand.hbm [shape: bf16[128,128], index: 3, kind: output, shape index: {}]
  %s4 = sld [smem:[#allocation0]]
  $region22: #{tpu_custom_call.1} parent=0
    _
  %s6 = ssub.s32 1, %s4
  %s7 = scalar_select 0, %s6, %s4
  $region1: #{tpu_custom_call.1} parent=0
    #allocation2 [shape = 'u8[32768]{0}', space=vmem, size = 0x8000, scoped, tag = 'output window, operand 0, single buffered']
    #allocation3 [shape = 's32[1]{0}', space=sflag, size = 0x4, scoped, tag = 'scoped memory for tpu_custom_call.1']
    %8 = vsyncpa [#allocation3], 0
    // Predicated region
    $region2: #{tpu_custom_call.1} parent=1 // pred_check
      _
    $region3: #{tpu_custom_call.1} parent=1 // pred_check_branch
      %10 = sbr.rel (0) target = $region5
    $region4: #{tpu_custom_call.1} parent=1 // pred_region
      _
    $region5: #{tpu_custom_call.1} parent=1 // pred_fallthru
      _
    // Predicated region
    $region6: #{tpu_custom_call.1} parent=1 // pred_check
      _
    $region7: #{tpu_custom_call.1} parent=1 // pred_check_branch
      %12 = sbr.rel (0) target = $region9
    $region8: #{tpu_custom_call.1} parent=1 // pred_region
      _
    $region9: #{tpu_custom_call.1} parent=1 // pred_fallthru
      _
    // Predicated region
    $region10: #{tpu_custom_call.1} parent=1 // pred_check
      _
    $region11: #{tpu_custom_call.1} parent=1 // pred_check_branch
      %14 = sbr.rel (0) target = $region13
    $region12: #{tpu_custom_call.1} parent=1 // pred_region
      _
    $region13: #{tpu_custom_call.1} parent=1 // pred_fallthru
      _
    %v16 = vld [vmem:[%s0] sm:$0xff]
    %v17 = vld [vmem:[%s0 + $0x8] sm:$0xff]
    %v18 = vld [vmem:[%s0 + $0x10] sm:$0xff]
    %v19 = vld [vmem:[%s0 + $0x18] sm:$0xff]
    %v20 = vld [vmem:[%s0 + $0x20] sm:$0xff]
    %v21 = vld [vmem:[%s0 + $0x28] sm:$0xff]
    %v22 = vld [vmem:[%s0 + $0x30] sm:$0xff]
    %v23 = vld [vmem:[%s0 + $0x38] sm:$0xff]
    %v24 = vld [vmem:[%s0 + $0x40] sm:$0xff]
    %v25 = vld [vmem:[%s0 + $0x48] sm:$0xff]
    %v26 = vld [vmem:[%s0 + $0x50] sm:$0xff]
    %v27 = vld [vmem:[%s0 + $0x58] sm:$0xff]
    %v28 = vld [vmem:[%s0 + $0x60] sm:$0xff]
    %v29 = vld [vmem:[%s0 + $0x68] sm:$0xff]
    %v30 = vld [vmem:[%s0 + $0x70] sm:$0xff]
    %v31 = vld [vmem:[%s0 + $0x78] sm:$0xff]
    %v32 = vpack.c.bf16 %v17, %v16
    %v33 = vpack.c.bf16 %v19, %v18
    %v34 = vpack.c.bf16 %v21, %v20
    %v35 = vpack.c.bf16 %v23, %v22
    %v36 = vpack.c.bf16 %v25, %v24
    %v37 = vpack.c.bf16 %v27, %v26
    %v38 = vpack.c.bf16 %v29, %v28
    %v39 = vpack.c.bf16 %v31, %v30
    %v40 = vld [vmem:[%s1] sm:$0xf]
    %v41 = vld [vmem:[%s1 + $0x4] sm:$0xf]
    %v42 = vld [vmem:[%s2] sm:$0x1]
    %v44 = vperm.slane %v42, 0
    %v48 = vunpack.c.l.b16 %v40
    %v49 = vunpack.c.l.b16 %v41
    %v50 = vpack.c.b16 %v49, %v48
    %vm52 = vcmask 130048
    %v54 = vsel %vm52, %v32, 0
    %v57 = vsel %vm52, %v33, 0
    %v60 = vsel %vm52, %v34, 0
    %v63 = vsel %vm52, %v35, 0
    %v66 = vsel %vm52, %v36, 0
    %v69 = vsel %vm52, %v37, 0
    %v72 = vsel %vm52, %v38, 0
    %v75 = vsel %vm52, %v39, 0
    %77 = vmatpush.bf16.msra.mxu0 0
    %78 = vmatpush.bf16.msra.mxu0 0
    %79 = vmatpush.bf16.msra.mxu0 0
    %80 = vmatpush.bf16.msra.mxu0 0
    %81 = vmatpush.bf16.msra.mxu0 0
    %82 = vmatpush.bf16.msra.mxu0 0
    %83 = vmatpush.bf16.msra.mxu0 0
    %84 = vmatpush.bf16.msra.mxu0 %v50
    %85 = vmatmul.bf16.gmra.mxu0 %v54
    %v86 = vpop.f32.mrf.mxu0
    %v87 = vadd.f32 %v44, %v86
    %v88 = vpop.f32.mrf.mxu0
    %v89 = vadd.f32 %v44, %v88
    %90 = vmatmul.bf16.gmra.mxu0 %v57
    %v91 = vpop.f32.mrf.mxu0
    %v92 = vadd.f32 %v44, %v91
    %v93 = vpop.f32.mrf.mxu0
    %v94 = vadd.f32 %v44, %v93
    %95 = vmatmul.bf16.gmra.mxu0 %v60
    %v96 = vpop.f32.mrf.mxu0
    %v97 = vadd.f32 %v44, %v96
    %v98 = vpop.f32.mrf.mxu0
    %v99 = vadd.f32 %v44, %v98
    %100 = vmatmul.bf16.gmra.mxu0 %v63
    %v101 = vpop.f32.mrf.mxu0
    %v102 = vadd.f32 %v44, %v101
    %v103 = vpop.f32.mrf.mxu0
    %v104 = vadd.f32 %v44, %v103
    %105 = vmatmul.bf16.gmra.mxu0 %v66
    %v106 = vpop.f32.mrf.mxu0
    %v107 = vadd.f32 %v44, %v106
    %v108 = vpop.f32.mrf.mxu0
    %v109 = vadd.f32 %v44, %v108
    %110 = vmatmul.bf16.gmra.mxu0 %v69
    %v111 = vpop.f32.mrf.mxu0
    %v112 = vadd.f32 %v44, %v111
    %v113 = vpop.f32.mrf.mxu0
    %v114 = vadd.f32 %v44, %v113
    %115 = vmatmul.bf16.gmra.mxu0 %v72
    %v116 = vpop.f32.mrf.mxu0
    %v117 = vadd.f32 %v44, %v116
    %v118 = vpop.f32.mrf.mxu0
    %v119 = vadd.f32 %v44, %v118
    %120 = vmatmul.bf16.gmra.mxu0 %v75
    %v121 = vpop.f32.mrf.mxu0
    %v122 = vadd.f32 %v44, %v121
    %v123 = vpop.f32.mrf.mxu0
    %v124 = vadd.f32 %v44, %v123
    %125 = vdwg.mxu0
    %v126 = vmax.f32 %v87, 0.0
    %v127 = vmax.f32 %v89, 0.0
    %v128 = vmax.f32 %v92, 0.0
    %v129 = vmax.f32 %v94, 0.0
    %v130 = vmax.f32 %v97, 0.0
    %v131 = vmax.f32 %v99, 0.0
    %v132 = vmax.f32 %v102, 0.0
    %v133 = vmax.f32 %v104, 0.0
    %v134 = vmax.f32 %v107, 0.0
    %v135 = vmax.f32 %v109, 0.0
    %v136 = vmax.f32 %v112, 0.0
    %v137 = vmax.f32 %v114, 0.0
    %v138 = vmax.f32 %v117, 0.0
    %v139 = vmax.f32 %v119, 0.0
    %v140 = vmax.f32 %v122, 0.0
    %v141 = vmax.f32 %v124, 0.0
    %v142 = vpack.c.bf16 %v126, %v126
    %v143 = vpack.c.bf16 %v127, %v127
    %v144 = vpack.c.bf16 %v128, %v128
    %v145 = vpack.c.bf16 %v129, %v129
    %v146 = vpack.c.bf16 %v130, %v130
    %v147 = vpack.c.bf16 %v131, %v131
    %v148 = vpack.c.bf16 %v132, %v132
    %v149 = vpack.c.bf16 %v133, %v133
    %v150 = vpack.c.bf16 %v134, %v134
    %v151 = vpack.c.bf16 %v135, %v135
    %v152 = vpack.c.bf16 %v136, %v136
    %v153 = vpack.c.bf16 %v137, %v137
    %v154 = vpack.c.bf16 %v138, %v138
    %v155 = vpack.c.bf16 %v139, %v139
    %v156 = vpack.c.bf16 %v140, %v140
    %v157 = vpack.c.bf16 %v141, %v141
    %158 = vst [vmem:[#allocation2] sm:$0xf] %v142
    %159 = vst [vmem:[#allocation2 + $0x4] sm:$0xf] %v143
    %160 = vst [vmem:[#allocation2 + $0x8] sm:$0xf] %v144
    %161 = vst [vmem:[#allocation2 + $0xc] sm:$0xf] %v145
    %162 = vst [vmem:[#allocation2 + $0x10] sm:$0xf] %v146
    %163 = vst [vmem:[#allocation2 + $0x14] sm:$0xf] %v147
    %164 = vst [vmem:[#allocation2 + $0x18] sm:$0xf] %v148
    %165 = vst [vmem:[#allocation2 + $0x1c] sm:$0xf] %v149
    %166 = vst [vmem:[#allocation2 + $0x20] sm:$0xf] %v150
    %167 = vst [vmem:[#allocation2 + $0x24] sm:$0xf] %v151
    %168 = vst [vmem:[#allocation2 + $0x28] sm:$0xf] %v152
    %169 = vst [vmem:[#allocation2 + $0x2c] sm:$0xf] %v153
    %170 = vst [vmem:[#allocation2 + $0x30] sm:$0xf] %v154
    %171 = vst [vmem:[#allocation2 + $0x34] sm:$0xf] %v155
    %172 = vst [vmem:[#allocation2 + $0x38] sm:$0xf] %v156
    %173 = vst [vmem:[#allocation2 + $0x3c] sm:$0xf] %v157
    // Predicated region
    $region14: #{tpu_custom_call.1} parent=1 // pred_check
      _
    $region15: #{tpu_custom_call.1} parent=1 // pred_check_branch
      %175 = sbr.rel (0) target = $region17
    $region16: #{tpu_custom_call.1} parent=1 // pred_region
      %177 = vsyncadd [#allocation3], 0
      %s178 = sshll.u32 [#allocation2], 4
      %s179 = int_to_ptr.vmem [resolvable:$true] %s178
      %s180 = sshll.u32 %s3, 4
      %s181 = int_to_ptr.hbm [resolvable:$true] %s180
      %186 = dma.vmem_to_hbm [thread:$0]  %s179, 1024, %s181, [#allocation3], 64, 64, 4
    $region17: #{tpu_custom_call.1} parent=1 // pred_fallthru
      _
    // Predicated region
    $region18: #{tpu_custom_call.1} parent=1 // pred_check
      _
    $region19: #{tpu_custom_call.1} parent=1 // pred_check_branch
      %188 = sbr.rel (0) target = $region21
    $region20: #{tpu_custom_call.1} parent=1 // pred_region
      %190 = dma.done [#allocation3], 1024
    $region21: #{tpu_custom_call.1} parent=1 // pred_fallthru
      _
    %191 = vsyncpa [#allocation3], 1

</llo_original>
